<compile_context>
chip_gen: v6e
topology: v6e:2x2x1
jax: 0.10.0
libtpu: 0.0.40
codegen_flags: <defaults>
</compile_context>

<pallas_src>
import functools

import jax
import jax.numpy as jnp
from jax.experimental import pallas as pl
from jax.experimental.pallas import tpu as pltpu

BN_EPS = 1e-5
NEG_SLOPE = 0.2
_VMEM_LIMIT = 32 * 1024 * 1024  # safe scoped-VMEM budget on v5e / v6e / v7x


def _round_up(a, b):
    return ((a + b - 1) // b) * b


def _leaky_relu(x):
    return jnp.where(x >= 0, x, NEG_SLOPE * x)


def _fm_linear(h, w_oi):
    """Feature-major tiny linear layer.

    h:     (K, T)  activations, features on sublanes, batch on lanes.
    w_oi:  (O, K)  weight in PyTorch (out_features, in_features) layout.
    Returns (O, T) = W @ h as an unrolled broadcast-FMA chain (full-lane VPU
    work; no 4-wide MXU pushes, no single-lane broadcasts).
    """
    k_dim = w_oi.shape[1]
    acc = w_oi[:, 0:1] * h[0:1, :]
    for k in range(1, k_dim):
        acc = acc + w_oi[:, k : k + 1] * h[k : k + 1, :]
    return acc


# ---------------------------------------------------------------------------
# Pass 1: z1^T = W1_pad @ x^T on the MXU (NT dot, lane-dense (hidden, T)
# result), stash z1^T, accumulate per-core BN1 sum / sum-of-squares.
# Zero-padded batch rows contribute exactly zero because the linear bias is
# dropped (it cancels against the BN mean subtraction).
# ---------------------------------------------------------------------------
def _z1_stats_kernel(x_ref, w1_ref, z1_ref, sum_ref, sq_ref, *, hidden):
    @pl.when(pl.program_id(1) == 0)
    def _():
        sum_ref[...] = jnp.zeros_like(sum_ref)
        sq_ref[...] = jnp.zeros_like(sq_ref)

    # (hp, d_in) x (T, d_in) contracted on the last dims -> (hp, T).
    z1p = jax.lax.dot_general(
        w1_ref[...], x_ref[...],
        dimension_numbers=(((1,), (1,)), ((), ())),
        preferred_element_type=jnp.float32)
    z1 = z1p[:hidden, :]                       # (hidden, T), lane-dense
    z1_ref[...] = z1
    sum_ref[0] += jnp.sum(z1, axis=1, keepdims=True)
    sq_ref[0] += jnp.sum(z1 * z1, axis=1, keepdims=True)


# ---------------------------------------------------------------------------
# Pass 2: h1 = LeakyReLU(BN1(z1)); z2 = W2 @ h1; accumulate BN2 statistics.
# Batch-padding columns are masked out of the sums (their h1 is nonzero).
# ---------------------------------------------------------------------------
def _bn2_stats_kernel(z1_ref, s1_ref, t1_ref, w2_ref, sum_ref, sq_ref, *,
                      tile_n, half, n_valid):
    c = pl.program_id(0)
    i = pl.program_id(1)

    @pl.when(i == 0)
    def _():
        sum_ref[...] = jnp.zeros_like(sum_ref)
        sq_ref[...] = jnp.zeros_like(sq_ref)

    h1 = _leaky_relu(z1_ref[...] * s1_ref[...] + t1_ref[...])   # (hidden, T)
    z2 = _fm_linear(h1, w2_ref[...])                            # (hidden, T)

    col = (c * half + i) * tile_n + jax.lax.broadcasted_iota(
        jnp.int32, (1, tile_n), 1)
    zm = z2 * (col < n_valid).astype(jnp.float32)               # mask once
    sum_ref[0] += jnp.sum(zm, axis=1, keepdims=True)
    sq_ref[0] += jnp.sum(zm * z2, axis=1, keepdims=True)


# ---------------------------------------------------------------------------
# Pass 3: full epilogue per tile (independent tiles -> "parallel" axis),
# lane-dense (out_dim, T) output blocks.
# ---------------------------------------------------------------------------
def _final_kernel(z1_ref, s1_ref, t1_ref, w2_ref, s2_ref, t2_ref,
                  w3_ref, b3_ref, o_ref):
    h1 = _leaky_relu(z1_ref[...] * s1_ref[...] + t1_ref[...])
    z2 = _fm_linear(h1, w2_ref[...])
    h2 = _leaky_relu(z2 * s2_ref[...] + t2_ref[...])
    o_ref[...] = (_fm_linear(h2, w3_ref[...]) + b3_ref[...]).astype(o_ref.dtype)


def mmd_discriminator(x, params, *, tile_n=None):
    """Forward pass of MMD_Discriminator. x: (n, d_in). Returns (n, out_dim)."""
    n, d_in = x.shape
    hidden = params["w1"].shape[0]
    out_dim = params["w3"].shape[0]
    hp = _round_up(hidden, 8)  # pad the dot's M-dim to a full sublane group

    # Stream x at its own precision (f32 or bf16); the MXU dot accumulates f32.
    compute_dtype = jnp.bfloat16 if x.dtype == jnp.bfloat16 else jnp.float32
    x = x.astype(compute_dtype)
    itemsize = jnp.dtype(compute_dtype).itemsize
    d_vmem = _round_up(d_in, 128) * itemsize   # lane-padded bytes / x row in VMEM

    # Tile size: multiple of 128 lanes (lane-dense z1/out blocks), sized so the
    # double-buffered x tile + z1 out block stay well inside scoped VMEM.
    if tile_n is None:
        budget = 16 * 1024 * 1024
        tile_n = budget // (2 * d_vmem + 2 * 32)   # 32 B/col for the z1 block
    tile_n = max(128, min(int(tile_n), 32768))
    tile_n = (tile_n // 128) * 128
    tile_n = min(tile_n, _round_up(max(n, 1), 128))

    npar = 2                                   # stats split across 2 TCs on v7x
    num_tiles = _round_up(pl.cdiv(n, tile_n), npar)
    half = num_tiles // npar
    n_pad = num_tiles * tile_n
    if n_pad != n:
        x = jnp.pad(x, ((0, n_pad - n), (0, 0)))

    # Layer-1 weight, PyTorch (out, in) layout, zero-padded to 8 output rows.
    w1p = jnp.zeros((hp, d_in), compute_dtype)
    w1p = w1p.at[:hidden, :].set(params["w1"].astype(compute_dtype))

    def _const(shape):  # parameter stays VMEM-resident across the grid
        return pl.BlockSpec(shape, lambda c, i: (0, 0))

    # ---------------- pass 1: z1 stash + BN1 partial stats ----------------
    z1, p_sum1, p_sq1 = pl.pallas_call(
        functools.partial(_z1_stats_kernel, hidden=hidden),
        out_shape=(
            jax.ShapeDtypeStruct((hidden, n_pad), jnp.float32),
            jax.ShapeDtypeStruct((npar, hidden, 1), jnp.float32),
            jax.ShapeDtypeStruct((npar, hidden, 1), jnp.float32),
        ),
        grid=(npar, half),
        in_specs=[
            pl.BlockSpec((tile_n, d_in), lambda c, i: (c * half + i, 0)),
            _const((hp, d_in)),
        ],
        out_specs=(
            pl.BlockSpec((hidden, tile_n), lambda c, i: (0, c * half + i)),
            pl.BlockSpec((1, hidden, 1), lambda c, i: (c, 0, 0)),
            pl.BlockSpec((1, hidden, 1), lambda c, i: (c, 0, 0)),
        ),
        compiler_params=pltpu.CompilerParams(
            dimension_semantics=("parallel", "arbitrary"),
            vmem_limit_bytes=_VMEM_LIMIT,
        ),
    )(x, w1p)

    # Finalize BN1 (biased variance, f32): fold gamma*rsqrt(var+eps) into one
    # per-feature scale + shift (b1 cancels exactly under training-mode BN).
    inv_n = jnp.float32(1.0 / n)
    s1 = jnp.sum(p_sum1, axis=0)               # (hidden, 1)
    q1 = jnp.sum(p_sq1, axis=0)
    m1 = s1 * inv_n
    v1 = jnp.maximum(q1 * inv_n - m1 * m1, 0.0)
    scale1 = params["g1"][:, None] * jax.lax.rsqrt(v1 + BN_EPS)
    shift1 = params["be1"][:, None] - scale1 * m1

    # ---------------- pass 2: BN2 partial stats ----------------
    p_sum2, p_sq2 = pl.pallas_call(
        functools.partial(_bn2_stats_kernel, tile_n=tile_n, half=half,
                          n_valid=n),
        out_shape=(
            jax.ShapeDtypeStruct((npar, hidden, 1), jnp.float32),
            jax.ShapeDtypeStruct((npar, hidden, 1), jnp.float32),
        ),
        grid=(npar, half),
        in_specs=[
            pl.BlockSpec((hidden, tile_n), lambda c, i: (0, c * half + i)),
            _const((hidden, 1)),
            _const((hidden, 1)),
            _const((hidden, hidden)),
        ],
        out_specs=(
            pl.BlockSpec((1, hidden, 1), lambda c, i: (c, 0, 0)),
            pl.BlockSpec((1, hidden, 1), lambda c, i: (c, 0, 0)),
        ),
        compiler_params=pltpu.CompilerParams(
            dimension_semantics=("parallel", "arbitrary"),
            vmem_limit_bytes=_VMEM_LIMIT,
        ),
    )(z1, scale1, shift1, params["w2"])

    s2 = jnp.sum(p_sum2, axis=0)
    q2 = jnp.sum(p_sq2, axis=0)
    m2 = s2 * inv_n
    v2 = jnp.maximum(q2 * inv_n - m2 * m2, 0.0)
    scale2 = params["g2"][:, None] * jax.lax.rsqrt(v2 + BN_EPS)
    shift2 = params["be2"][:, None] - scale2 * m2

    # ---------------- pass 3: epilogue, lane-dense output ----------------
    out_fm = pl.pallas_call(
        _final_kernel,
        out_shape=jax.ShapeDtypeStruct((out_dim, n_pad), jnp.float32),
        grid=(num_tiles,),
        in_specs=[
            pl.BlockSpec((hidden, tile_n), lambda i: (0, i)),
            pl.BlockSpec((hidden, 1), lambda i: (0, 0)),
            pl.BlockSpec((hidden, 1), lambda i: (0, 0)),
            pl.BlockSpec((hidden, hidden), lambda i: (0, 0)),
            pl.BlockSpec((hidden, 1), lambda i: (0, 0)),
            pl.BlockSpec((hidden, 1), lambda i: (0, 0)),
            pl.BlockSpec((out_dim, hidden), lambda i: (0, 0)),
            pl.BlockSpec((out_dim, 1), lambda i: (0, 0)),
        ],
        out_specs=pl.BlockSpec((out_dim, tile_n), lambda i: (0, i)),
        compiler_params=pltpu.CompilerParams(
            dimension_semantics=("parallel",),
            vmem_limit_bytes=_VMEM_LIMIT,
        ),
    )(z1, scale1, shift1, params["w2"], scale2, shift2,
      params["w3"], params["b3"][:, None])

    return out_fm[:, :n].T


def init_params(key, input_dim, output_dim, hidden=4):
    """PyTorch-layout params: weights (out, in), uniform(+-1/sqrt(fan_in)).

    b1/b2 are kept (the PyTorch module has them) but are mathematically dead
    in training-mode BN, so the kernels never read them — the reference below
    still uses them, which validates the cancellation.
    """
    ks = jax.random.split(key, 6)

    def lin(kw, kb, fan_in, fan_out):
        bound = 1.0 / (fan_in ** 0.5)
        w = jax.random.uniform(kw, (fan_out, fan_in), jnp.float32, -bound, bound)
        b = jax.random.uniform(kb, (fan_out,), jnp.float32, -bound, bound)
        return w, b

    w1, b1 = lin(ks[0], ks[1], input_dim, hidden)
    w2, b2 = lin(ks[2], ks[3], hidden, hidden)
    w3, b3 = lin(ks[4], ks[5], hidden, output_dim)
    return dict(
        w1=w1, b1=b1, g1=jnp.ones((hidden,), jnp.float32),
        be1=jnp.zeros((hidden,), jnp.float32),
        w2=w2, b2=b2, g2=jnp.ones((hidden,), jnp.float32),
        be2=jnp.zeros((hidden,), jnp.float32),
        w3=w3, b3=b3,
    )


def _reference(x, p):
    """Pure-JAX reference mirroring the PyTorch forward (training-mode BN)."""
    h = x @ p["w1"].T + p["b1"]
    m = h.mean(0)
    v = ((h - m) ** 2).mean(0)
    h = p["g1"] * (h - m) / jnp.sqrt(v + BN_EPS) + p["be1"]
    h = jnp.where(h >= 0, h, NEG_SLOPE * h)

    h = h @ p["w2"].T + p["b2"]
    m = h.mean(0)
    v = ((h - m) ** 2).mean(0)
    h = p["g2"] * (h - m) / jnp.sqrt(v + BN_EPS) + p["be2"]
    h = jnp.where(h >= 0, h, NEG_SLOPE * h)

    return h @ p["w3"].T + p["b3"]


if __name__ == "__main__":
    input_dim = 32
    output_dim = 2
    batch = 300  # not a multiple of the tile -> exercises padding / masking

    key = jax.random.PRNGKey(0)
    kx, kp = jax.random.split(key)
    x = jax.random.normal(kx, (batch, input_dim), jnp.float32)
    params = init_params(kp, input_dim, output_dim)

    # tile_n=128 -> 4 batch tiles (one ragged, one pure padding), 2 parallel
    # stat slices: exercises the tiled two-phase BatchNorm path at demo scale.
    out = mmd_discriminator(x, params, tile_n=128)
    out = jax.block_until_ready(out)

    ref = _reference(x, params)
    assert out.shape == (batch, output_dim)
    assert jnp.allclose(out, ref, atol=2e-4, rtol=2e-4), "f32 mismatch vs reference"

    # bf16-streamed x (halves the HBM-bound pass-1 traffic); f32 accumulation.
    out_bf16 = jax.block_until_ready(
        mmd_discriminator(x.astype(jnp.bfloat16), params, tile_n=128))
    assert out_bf16.shape == (batch, output_dim)
    assert jnp.allclose(out_bf16, ref, atol=5e-2, rtol=5e-2), "bf16 path mismatch"

    print("KERNEL_OK")
</pallas_src>

<mosaic_0001>
module attributes {stable_mosaic.version = 11 : i64} {
  func.func @_z1_stats_kernel(%arg0: i32, %arg1: i32, %arg2: memref<128x32xf32, #tpu.memory_space<vmem>>, %arg3: memref<8x32xf32, #tpu.memory_space<vmem>>, %arg4: memref<4x128xf32, #tpu.memory_space<vmem>>, %arg5: memref<1x4x1xf32, #tpu.memory_space<vmem>>, %arg6: memref<1x4x1xf32, #tpu.memory_space<vmem>>) attributes {dimension_semantics = [#tpu.dimension_semantics<parallel>, #tpu.dimension_semantics<arbitrary>], iteration_bounds = array<i64: 2, 2>, scalar_prefetch = 0 : i64, scratch_operands = 0 : i64, tpu.core_type = #tpu.core_type<tc>, window_params = [{transform_indices = @transform_0, window_bounds = array<i64: 128, 32>}, {pipeline_mode = #tpu.pipeline_mode<synchronous>, transform_indices = @transform_1, window_bounds = array<i64: 8, 32>}, {transform_indices = @transform_2, window_bounds = array<i64: 4, 128>}, {transform_indices = @transform_3, window_bounds = array<i64: 1, 4, 1>}, {transform_indices = @transform_4, window_bounds = array<i64: 1, 4, 1>}]} {
    %c0_i32 = arith.constant 0 : i32
    %0 = arith.cmpi eq, %arg1, %c0_i32 : i32
    %1 = arith.extui %0 : i1 to i32
    %c0_i32_0 = arith.constant 0 : i32
    %2 = arith.cmpi ne, %1, %c0_i32_0 : i32
    scf.if %2 {
      %cst_20 = arith.constant 0.000000e+00 : f32
      %25 = vector.broadcast %cst_20 : f32 to vector<1x4x1xf32>
      %c0_21 = arith.constant 0 : index
      %c0_22 = arith.constant 0 : index
      %c0_23 = arith.constant 0 : index
      %26 = vector.load %arg5[%c0_21, %c0_22, %c0_23] : memref<1x4x1xf32, #tpu.memory_space<vmem>>, vector<1x4x1xf32>
      tpu.vector_store %arg5[%c0_21, %c0_22, %c0_23], %25 {strides = array<i32>} : memref<1x4x1xf32, #tpu.memory_space<vmem>>, vector<1x4x1xf32>,
      %cst_24 = arith.constant 0.000000e+00 : f32
      %27 = vector.broadcast %cst_24 : f32 to vector<1x4x1xf32>
      %c0_25 = arith.constant 0 : index
      %c0_26 = arith.constant 0 : index
      %c0_27 = arith.constant 0 : index
      %28 = vector.load %arg6[%c0_25, %c0_26, %c0_27] : memref<1x4x1xf32, #tpu.memory_space<vmem>>, vector<1x4x1xf32>
      tpu.vector_store %arg6[%c0_25, %c0_26, %c0_27], %27 {strides = array<i32>} : memref<1x4x1xf32, #tpu.memory_space<vmem>>, vector<1x4x1xf32>,
    } else {
    }
    %c0 = arith.constant 0 : index
    %c0_1 = arith.constant 0 : index
    %3 = vector.load %arg3[%c0, %c0_1] : memref<8x32xf32, #tpu.memory_space<vmem>>, vector<8x32xf32>
    %c0_2 = arith.constant 0 : index
    %c0_3 = arith.constant 0 : index
    %4 = vector.load %arg2[%c0_2, %c0_3] : memref<128x32xf32, #tpu.memory_space<vmem>>, vector<128x32xf32>
    %cst = arith.constant dense<0.000000e+00> : vector<8x128xf32>
    %5 = tpu.matmul %3, %4, %cst {dimension_numbers = #tpu.dot_dimension_numbers<[1], [1], [0], [0], [0, 0, 1, 0], [], []>} : vector<8x32xf32>, vector<128x32xf32>, vector<8x128xf32> -> vector<8x128xf32>
    %6 = vector.extract_strided_slice %5 {offsets = [0, 0], sizes = [4, 128], strides = [1, 1]} : vector<8x128xf32> to vector<4x128xf32>
    %c0_4 = arith.constant 0 : index
    %c0_5 = arith.constant 0 : index
    %7 = vector.load %arg4[%c0_4, %c0_5] : memref<4x128xf32, #tpu.memory_space<vmem>>, vector<4x128xf32>
    tpu.vector_store %arg4[%c0_4, %c0_5], %6 {strides = array<i32>} : memref<4x128xf32, #tpu.memory_space<vmem>>, vector<4x128xf32>,
    %c0_6 = arith.constant 0 : index
    %c0_7 = arith.constant 0 : index
    %c0_8 = arith.constant 0 : index
    %8 = vector.load %arg5[%c0_6, %c0_7, %c0_8] : memref<1x4x1xf32, #tpu.memory_space<vmem>>, vector<1x4x1xf32>
    %9 = vector.shape_cast %8 : vector<1x4x1xf32> to vector<4x1xf32>
    %cst_9 = arith.constant dense<0.000000e+00> : vector<4xf32>
    %10 = vector.multi_reduction <add>, %6, %cst_9 [1] : vector<4x128xf32> to vector<4xf32>
    %11 = vector.shape_cast %10 : vector<4xf32> to vector<4x1xf32>
    %12 = arith.addf %9, %11 : vector<4x1xf32>
    %c0_10 = arith.constant 0 : index
    %c0_11 = arith.constant 0 : index
    %c0_12 = arith.constant 0 : index
    %13 = vector.load %arg5[%c0_10, %c0_11, %c0_12] : memref<1x4x1xf32, #tpu.memory_space<vmem>>, vector<1x4x1xf32>
    %14 = vector.shape_cast %13 : vector<1x4x1xf32> to vector<4x1xf32>
    %15 = vector.shape_cast %12 : vector<4x1xf32> to vector<1x4x1xf32>
    tpu.vector_store %arg5[%c0_10, %c0_11, %c0_12], %15 {strides = array<i32>} : memref<1x4x1xf32, #tpu.memory_space<vmem>>, vector<1x4x1xf32>,
    %c0_13 = arith.constant 0 : index
    %c0_14 = arith.constant 0 : index
    %c0_15 = arith.constant 0 : index
    %16 = vector.load %arg6[%c0_13, %c0_14, %c0_15] : memref<1x4x1xf32, #tpu.memory_space<vmem>>, vector<1x4x1xf32>
    %17 = vector.shape_cast %16 : vector<1x4x1xf32> to vector<4x1xf32>
    %18 = arith.mulf %6, %6 : vector<4x128xf32>
    %cst_16 = arith.constant dense<0.000000e+00> : vector<4xf32>
    %19 = vector.multi_reduction <add>, %18, %cst_16 [1] : vector<4x128xf32> to vector<4xf32>
    %20 = vector.shape_cast %19 : vector<4xf32> to vector<4x1xf32>
    %21 = arith.addf %17, %20 : vector<4x1xf32>
    %c0_17 = arith.constant 0 : index
    %c0_18 = arith.constant 0 : index
    %c0_19 = arith.constant 0 : index
    %22 = vector.load %arg6[%c0_17, %c0_18, %c0_19] : memref<1x4x1xf32, #tpu.memory_space<vmem>>, vector<1x4x1xf32>
    %23 = vector.shape_cast %22 : vector<1x4x1xf32> to vector<4x1xf32>
    %24 = vector.shape_cast %21 : vector<4x1xf32> to vector<1x4x1xf32>
    tpu.vector_store %arg6[%c0_17, %c0_18, %c0_19], %24 {strides = array<i32>} : memref<1x4x1xf32, #tpu.memory_space<vmem>>, vector<1x4x1xf32>,
    return
  }
  func.func @transform_0(%arg0: i32, %arg1: i32) -> (i32, i32) {
    %c2_i32 = arith.constant 2 : i32
    %0 = arith.muli %arg0, %c2_i32 : i32
    %1 = arith.addi %0, %arg1 : i32
    %c0_i32 = arith.constant 0 : i32
    %c0_i32_0 = arith.constant 0 : i32
    return %1, %c0_i32 : i32, i32
  }
  func.func @transform_1(%arg0: i32, %arg1: i32) -> (i32, i32) {
    %c0_i32 = arith.constant 0 : i32
    %c0_i32_0 = arith.constant 0 : i32
    %c0_i32_1 = arith.constant 0 : i32
    return %c0_i32, %c0_i32_0 : i32, i32
  }
  func.func @transform_2(%arg0: i32, %arg1: i32) -> (i32, i32) {
    %c2_i32 = arith.constant 2 : i32
    %0 = arith.muli %arg0, %c2_i32 : i32
    %1 = arith.addi %0, %arg1 : i32
    %c0_i32 = arith.constant 0 : i32
    %c0_i32_0 = arith.constant 0 : i32
    return %c0_i32, %1 : i32, i32
  }
  func.func @transform_3(%arg0: i32, %arg1: i32) -> (i32, i32, i32) {
    %c0_i32 = arith.constant 0 : i32
    %c0_i32_0 = arith.constant 0 : i32
    %c0_i32_1 = arith.constant 0 : i32
    return %arg0, %c0_i32, %c0_i32_0 : i32, i32, i32
  }
  func.func @transform_4(%arg0: i32, %arg1: i32) -> (i32, i32, i32) {
    %c0_i32 = arith.constant 0 : i32
    %c0_i32_0 = arith.constant 0 : i32
    %c0_i32_1 = arith.constant 0 : i32
    return %arg0, %c0_i32, %c0_i32_0 : i32, i32, i32
  }
}

</mosaic_0001>

<llo_original>
// kernel: tpu_custom_call.1
$region0: #{tpu_custom_call.1}
  #allocation0 [shape = 'u32[]', space=smem, size = 0x4, offset = 0x4, fixed_abs, tag = 'smem constant byte address 0x4 - core index']
  #allocation1 [shape = 'u32[144,128]{1,0:T(1,128)}', space=vmem, size = 0x12000, scoped, tag = 'internal scratch']
  %s0 = inlined_call_operand.vmem [shape: f32[512,32], index: 0, kind: input, shape index: {}]
  %s1 = inlined_call_operand.vmem [shape: f32[8,32], index: 1, kind: input, shape index: {}]
  %s2 = inlined_call_operand.hbm [shape: f32[4,512], index: 2, kind: output, shape index: {0}]
  %s3 = inlined_call_operand.vmem [shape: f32[2,4,1], index: 3, kind: output, shape index: {1}]
  %s4 = inlined_call_operand.vmem [shape: f32[2,4,1], index: 4, kind: output, shape index: {2}]
  %5 = xla_tuple %s2, %s3, %s4
  %s6 = sld [smem:[#allocation0]]
  $region61: #{tpu_custom_call.1} parent=0
    _
  %s8 = ssub.s32 1, %s6
  %s9 = scalar_select 0, %s8, %s6
  $region1: #{tpu_custom_call.1} parent=0
    #allocation2 [shape = 'u8[4096]{0}', space=vmem, size = 0x1000, scoped, tag = 'output window, operand 0']
    #allocation3 [shape = 's32[2]{0}', space=sflag, size = 0x8, scoped, tag = 'scoped memory for tpu_custom_call.1']
    %10 = vsyncpa [#allocation3], 0
    %s11 = scalar_lea.sflag [#allocation3], 1
    %12 = vsyncpa %s11, 0
    loop: start=0, step=1, limit=6
    $region2: #{tpu_custom_call.1} parent=1 // loop_pre_header
      _
    $region3: #{tpu_custom_call.1} parent=1 // loop_header
      %s14 = sphi 0, %s18
      %p15 = scmp.ge.s32.totalorder %s14, 6
      %s21 = sphi 0, %s33
      %s22 = sphi 0, %s29
      %s23 = sphi 0, %s21
      %s24 = sphi 0, %s22
      %s25 = sphi 0, %s23
      %s26 = sphi 0, %s24
      %s40 = sphi 0, %s42
      %s43 = sphi 0, %s40
      %s44 = sphi 0, %s43
      %s60 = sphi 0, %s44
      %s64 = sphi 0, %s64
      %s66 = sphi 0, %s64
      %s67 = sphi 0, %s66
      %s81 = sphi 0, %s67
      %s91 = sphi 0, %s93
      %s94 = sphi 0, %s91
      %s95 = sphi 0, %s94
      %s111 = sphi 0, %s95
      %s117 = sphi 0, %s119
      %s120 = sphi 0, %s117
      %s121 = sphi 0, %s120
      %s137 = sphi 0, %s121
      %s143 = sphi 0, %s145
      %s146 = sphi 0, %s143
      %s147 = sphi 0, %s146
      %s163 = sphi 0, %s147
    $region4: #{tpu_custom_call.1} parent=1 // loop_header_branch
      %17 = sbr.rel (%p15) target = $region8
    $region5: #{tpu_custom_call.1} parent=1 // loop_body
      %s19 = ssub.s32 %s14, 1
      %s20 = ssub.s32 %s14, 2
      %s27 = sadd.s32 1, %s22
      %p28 = scmp.ge.s32.totalorder %s27, 2
      %s29 = scalar_select %p28, 0, %s27
      %s30 = sadd.s32 1, %s21
      %s31 = scalar_select %p28, %s30, %s21
      %p32 = scmp.ge.s32.totalorder %s31, 2
      %s33 = scalar_select %p32, 0, %s31
      %s34 = smul.u32 %s21, 2
      %s35 = sadd.s32 %s34, %s22
      %s36 = smul.u32 %s33, 2
      %s37 = sadd.s32 %s36, %s29
      %s38 = ssub.s32 %s35, %s37
      %p39 = scmp.eq.s32.totalorder %s38, 0
      %s41 = sadd.s32 %s40, 1
      %s42 = scalar_select %p39, %s40, %s41
      %p45 = pneg %p39
      %p46 = scmp.eq.s32.totalorder %s14, 3
      %p47 = por %p45, %p46
      %p48 = scmp.ne.s32.totalorder %s40, %s43
      %p49 = scmp.eq.s32.totalorder %s14, 0
      %p50 = por %p48, %p49
      %p51 = scmp.ne.s32.totalorder %s40, %s43
      %p52 = scmp.eq.s32.totalorder %s19, 3
      %p53 = por %p51, %p52
      %p54 = scmp.ne.s32.totalorder %s43, %s44
      %p55 = scmp.eq.s32.totalorder %s19, 0
      %p56 = por %p54, %p55
      %p57 = scmp.ne.s32.totalorder %s43, %s44
      %p58 = scmp.eq.s32.totalorder %s20, 3
      %p59 = por %p57, %p58
      %p61 = scmp.ne.s32.totalorder %s44, %s60
      %p62 = scmp.eq.s32.totalorder %s20, 0
      %p63 = por %p61, %p62
      %s65 = sadd.s32 %s64, 1
      %p68 = scmp.eq.s32.totalorder %s14, 3
      %p69 = scmp.ne.s32.totalorder %s64, %s66
      %p70 = scmp.eq.s32.totalorder %s14, 0
      %p71 = por %p69, %p70
      %p72 = scmp.ne.s32.totalorder %s64, %s66
      %p73 = scmp.eq.s32.totalorder %s19, 3
      %p74 = por %p72, %p73
      %p75 = scmp.ne.s32.totalorder %s66, %s67
      %p76 = scmp.eq.s32.totalorder %s19, 0
      %p77 = por %p75, %p76
      %p78 = scmp.ne.s32.totalorder %s66, %s67
      %p79 = scmp.eq.s32.totalorder %s20, 3
      %p80 = por %p78, %p79
      %p82 = scmp.ne.s32.totalorder %s67, %s81
      %p83 = scmp.eq.s32.totalorder %s20, 0
      %p84 = por %p82, %p83
      %s85 = smul.u32 %s21, 2
      %s86 = sadd.s32 %s85, %s22
      %s87 = smul.u32 %s33, 2
      %s88 = sadd.s32 %s87, %s29
      %s89 = ssub.s32 %s86, %s88
      %p90 = scmp.eq.s32.totalorder %s89, 0
      %s92 = sadd.s32 %s91, 1
      %s93 = scalar_select %p90, %s91, %s92
      %p96 = pneg %p90
      %p97 = scmp.eq.s32.totalorder %s14, 3
      %p98 = por %p96, %p97
      %p99 = scmp.ne.s32.totalorder %s91, %s94
      %p100 = scmp.eq.s32.totalorder %s14, 0
      %p101 = por %p99, %p100
      %p102 = scmp.ne.s32.totalorder %s91, %s94
      %p103 = scmp.eq.s32.totalorder %s19, 3
      %p104 = por %p102, %p103
      %p105 = scmp.ne.s32.totalorder %s94, %s95
      %p106 = scmp.eq.s32.totalorder %s19, 0
      %p107 = por %p105, %p106
      %p108 = scmp.ne.s32.totalorder %s94, %s95
      %p109 = scmp.eq.s32.totalorder %s20, 3
      %p110 = por %p108, %p109
      %p112 = scmp.ne.s32.totalorder %s95, %s111
      %p113 = scmp.eq.s32.totalorder %s20, 0
      %p114 = por %p112, %p113
      %s115 = ssub.s32 %s21, %s33
      %p116 = scmp.eq.s32.totalorder %s115, 0
      %s118 = sadd.s32 %s117, 1
      %s119 = scalar_select %p116, %s117, %s118
      %p122 = pneg %p116
      %p123 = scmp.eq.s32.totalorder %s14, 3
      %p124 = por %p122, %p123
      %p125 = scmp.ne.s32.totalorder %s117, %s120
      %p126 = scmp.eq.s32.totalorder %s14, 0
      %p127 = por %p125, %p126
      %p128 = scmp.ne.s32.totalorder %s117, %s120
      %p129 = scmp.eq.s32.totalorder %s19, 3
      %p130 = por %p128, %p129
      %p131 = scmp.ne.s32.totalorder %s120, %s121
      %p132 = scmp.eq.s32.totalorder %s19, 0
      %p133 = por %p131, %p132
      %p134 = scmp.ne.s32.totalorder %s120, %s121
      %p135 = scmp.eq.s32.totalorder %s20, 3
      %p136 = por %p134, %p135
      %p138 = scmp.ne.s32.totalorder %s121, %s137
      %p139 = scmp.eq.s32.totalorder %s20, 0
      %p140 = por %p138, %p139
      %s141 = ssub.s32 %s21, %s33
      %p142 = scmp.eq.s32.totalorder %s141, 0
      %s144 = sadd.s32 %s143, 1
      %s145 = scalar_select %p142, %s143, %s144
      %p148 = pneg %p142
      %p149 = scmp.eq.s32.totalorder %s14, 3
      %p150 = por %p148, %p149
      %p151 = scmp.ne.s32.totalorder %s143, %s146
      %p152 = scmp.eq.s32.totalorder %s14, 0
      %p153 = por %p151, %p152
      %p154 = scmp.ne.s32.totalorder %s143, %s146
      %p155 = scmp.eq.s32.totalorder %s19, 3
      %p156 = por %p154, %p155
      %p157 = scmp.ne.s32.totalorder %s146, %s147
      %p158 = scmp.eq.s32.totalorder %s19, 0
      %p159 = por %p157, %p158
      %p160 = scmp.ne.s32.totalorder %s146, %s147
      %p161 = scmp.eq.s32.totalorder %s20, 3
      %p162 = por %p160, %p161
      %p164 = scmp.ne.s32.totalorder %s147, %s163
      %p165 = scmp.eq.s32.totalorder %s20, 0
      %p166 = por %p164, %p165
      %p167 = scmp.le.s32.totalorder 1, %s14
      %p168 = scmp.lt.s32.totalorder %s14, 5
      %p169 = pnand %p167, %p168
      %p170 = pneg %p169
      // Predicated region
      $region9: #{tpu_custom_call.1} parent=5 // pred_check
        _
      $region10: #{tpu_custom_call.1} parent=5 // pred_check_branch
        %172 = sbr.rel (%p169) target = $region12
      $region11: #{tpu_custom_call.1} parent=5 // pred_region
        %s173 = ssub.s32 %s14, 1
        // Predicated region
        $region13: #{tpu_custom_call.1} parent=11 // pred_check
          %p174 = pneg %p77
        $region14: #{tpu_custom_call.1} parent=11 // pred_check_branch
          %176 = sbr.rel (%p174) target = $region16
        $region15: #{tpu_custom_call.1} parent=11 // pred_region
          _
        $region16: #{tpu_custom_call.1} parent=11 // pred_fallthru
          _
      $region12: #{tpu_custom_call.1} parent=5 // pred_fallthru
        _
      %p177 = scmp.lt.s32.totalorder %s14, 4
      // Predicated region
      $region17: #{tpu_custom_call.1} parent=5 // pred_check
        %p178 = pneg %p177
      $region18: #{tpu_custom_call.1} parent=5 // pred_check_branch
        %180 = sbr.rel (%p178) target = $region20
      $region19: #{tpu_custom_call.1} parent=5 // pred_region
        // Predicated region
        $region21: #{tpu_custom_call.1} parent=19 // pred_check
          %p181 = pneg %p50
        $region22: #{tpu_custom_call.1} parent=19 // pred_check_branch
          %183 = sbr.rel (%p181) target = $region24
        $region23: #{tpu_custom_call.1} parent=19 // pred_region
          %s184 = smul.u32 %s21, 2
          %s185 = sadd.s32 %s184, %s22
          %s186 = smul.u32 16, %s185
          %p187 = scmp.lt.s32.totalorder %s186, 63
          %s188 = scalar_select %p187, %s186, 63
          %s189 = smul.addr %s188, 8
          %s190 = scalar_lea.vmem %s0, %s189
          %s191 = smul.u32 %s21, 2
          %s192 = sadd.s32 %s191, %s22
          %s193 = smul.u32 16, %s192
        $region24: #{tpu_custom_call.1} parent=19 // pred_fallthru
          _
      $region20: #{tpu_custom_call.1} parent=5 // pred_fallthru
        _
      %p194 = scmp.le.s32.totalorder 1, %s14
      %p195 = scmp.lt.s32.totalorder %s14, 5
      %p196 = pnand %p194, %p195
      %p197 = pneg %p196
      // Predicated region
      $region25: #{tpu_custom_call.1} parent=5 // pred_check
        _
      $region26: #{tpu_custom_call.1} parent=5 // pred_check_branch
        %199 = sbr.rel (%p196) target = $region28
      $region27: #{tpu_custom_call.1} parent=5 // pred_region
        %s200 = ssub.s32 %s14, 1
        %s201 = smul.u32 %s23, 2
        %s202 = sadd.s32 %s201, %s24
        %s203 = smul.u32 16, %s202
        %p204 = scmp.lt.s32.totalorder %s203, 63
        %s205 = scalar_select %p204, %s203, 63
        %s206 = smul.addr %s205, 8
        %s207 = scalar_lea.vmem %s0, %s206
        %p208 = pneg %p56
        %p209 = pneg %p53
        %p210 = pneg %p77
        %p211 = pneg %p74
        %p212 = pneg %p107
        %p213 = pneg %p104
        %s214 = sand.u32 %s94, 1
        %s215 = scalar_lea.sflag [#allocation3], %s214
        %s216 = sand.u32 %s94, 1
        %s217 = smul.addr %s216, 4
        %s218 = scalar_lea.vmem [#allocation2], %s217
        %p219 = pneg %p133
        %p220 = pneg %p130
        %p221 = scmp.lt.s32.totalorder %s23, 1
        %s222 = scalar_select %p221, %s23, 1
        %s223 = smul.addr %s222, 4
        %s224 = scalar_lea.vmem %s3, %s223
        %p225 = pneg %p159
        %p226 = pneg %p156
        %p227 = scmp.lt.s32.totalorder %s23, 1
        %s228 = scalar_select %p227, %s23, 1
        %s229 = smul.addr %s228, 4
        %s230 = scalar_lea.vmem %s4, %s229
        %s231 = smul.u32 %s23, 2
        %s232 = sadd.s32 %s231, %s24
        %s233 = smul.u32 16, %s232
        %p234 = scmp.lt.s32.totalorder %s233, 63
        %s235 = scalar_select %p234, %s233, 63
        %s236 = smul.addr %s235, 8
        %s237 = scalar_lea.vmem %s0, %s236
        %s238 = smul.u32 %s23, 2
        %s239 = sadd.s32 %s238, %s24
        %s240 = smul.u32 16, %s239
        %s241 = smul.u32 %s23, 2
        %s242 = sadd.s32 %s241, %s24
        %p243 = scmp.lt.s32.totalorder %s23, 1
        %s244 = scalar_select %p243, %s23, 1
        %s245 = smul.addr %s244, 4
        %s246 = scalar_lea.vmem %s3, %s245
        %p247 = scmp.lt.s32.totalorder %s23, 1
        %s248 = scalar_select %p247, %s23, 1
        %s249 = smul.addr %s248, 4
        %s250 = scalar_lea.vmem %s4, %s249
        %p251 = scmp.eq.s32.totalorder %s24, 0
        // Predicated region
        $region29: #{tpu_custom_call.1} parent=27 // pred_check
          %p252 = pneg %p251
        $region30: #{tpu_custom_call.1} parent=27 // pred_check_branch
          %254 = sbr.rel (%p252) target = $region32
        $region31: #{tpu_custom_call.1} parent=27 // pred_region
          %vm255 = vcmask 3072
          %256 = vst.msk [vmem:[%s246] sm:$0xf] %vm255, 0.0
          %257 = vst.msk [vmem:[%s250] sm:$0xf] %vm255, 0.0
        $region32: #{tpu_custom_call.1} parent=27 // pred_fallthru
          _
        %v258 = vld [vmem:[%s1] sm:$0xff]
        %v259 = vld [vmem:[%s237] sm:$0xff]
        %v260 = vld [vmem:[%s237 + $0x8] sm:$0xff]
        %v261 = vld [vmem:[%s237 + $0x10] sm:$0xff]
        %v262 = vld [vmem:[%s237 + $0x18] sm:$0xff]
        %v263 = vld [vmem:[%s237 + $0x20] sm:$0xff]
        %v264 = vld [vmem:[%s237 + $0x28] sm:$0xff]
        %v265 = vld [vmem:[%s237 + $0x30] sm:$0xff]
        %v266 = vld [vmem:[%s237 + $0x38] sm:$0xff]
        %v267 = vld [vmem:[%s237 + $0x40] sm:$0xff]
        %v268 = vld [vmem:[%s237 + $0x48] sm:$0xff]
        %v269 = vld [vmem:[%s237 + $0x50] sm:$0xff]
        %v270 = vld [vmem:[%s237 + $0x58] sm:$0xff]
        %v271 = vld [vmem:[%s237 + $0x60] sm:$0xff]
        %v272 = vld [vmem:[%s237 + $0x68] sm:$0xff]
        %v273 = vld [vmem:[%s237 + $0x70] sm:$0xff]
        %v274 = vld [vmem:[%s237 + $0x78] sm:$0xff]
        %vm275 = vcmask 261120
        %v277 = vsel %vm275, %v258, 0
        %v280 = vsel %vm275, %v259, 0
        %v283 = vsel %vm275, %v260, 0
        %v286 = vsel %vm275, %v261, 0
        %v289 = vsel %vm275, %v262, 0
        %v292 = vsel %vm275, %v263, 0
        %v295 = vsel %vm275, %v264, 0
        %v298 = vsel %vm275, %v265, 0
        %v301 = vsel %vm275, %v266, 0
        %v304 = vsel %vm275, %v267, 0
        %v307 = vsel %vm275, %v268, 0
        %v310 = vsel %vm275, %v269, 0
        %v313 = vsel %vm275, %v270, 0
        %v316 = vsel %vm275, %v271, 0
        %v319 = vsel %vm275, %v272, 0
        %v322 = vsel %vm275, %v273, 0
        %v325 = vsel %vm275, %v274, 0
        %327 = vmatprep.subr.mxu0 0.0
        %328 = vmatpush1.xpose.msra.mxu0 %v325
        %329 = vmatprep.subr.mxu0 0.0
        %330 = vmatpush1.xpose.msra.mxu0 %v322
        %331 = vmatprep.subr.mxu0 0.0
        %332 = vmatpush1.xpose.msra.mxu0 %v319
        %333 = vmatprep.subr.mxu0 0.0
        %334 = vmatpush1.xpose.msra.mxu0 %v316
        %335 = vmatprep.subr.mxu0 0.0
        %336 = vmatpush1.xpose.msra.mxu0 %v313
        %337 = vmatprep.subr.mxu0 0.0
        %338 = vmatpush1.xpose.msra.mxu0 %v310
        %339 = vmatprep.subr.mxu0 0.0
        %340 = vmatpush1.xpose.msra.mxu0 %v307
        %341 = vmatprep.subr.mxu0 0.0
        %342 = vmatpush1.xpose.msra.mxu0 %v304
        %343 = vmatprep.subr.mxu0 0.0
        %344 = vmatpush1.xpose.msra.mxu0 %v301
        %345 = vmatprep.subr.mxu0 0.0
        %346 = vmatpush1.xpose.msra.mxu0 %v298
        %347 = vmatprep.subr.mxu0 0.0
        %348 = vmatpush1.xpose.msra.mxu0 %v295
        %349 = vmatprep.subr.mxu0 0.0
        %350 = vmatpush1.xpose.msra.mxu0 %v292
        %351 = vmatprep.subr.mxu0 0.0
        %352 = vmatpush1.xpose.msra.mxu0 %v289
        %353 = vmatprep.subr.mxu0 0.0
        %354 = vmatpush1.xpose.msra.mxu0 %v286
        %355 = vmatprep.subr.mxu0 0.0
        %356 = vmatpush1.xpose.msra.mxu0 %v283
        %357 = vmatprep.subr.mxu0 0.0
        %358 = vmatpush1.xpose.msra.mxu0 %v280
        %359 = vmatprep.subr.mxu0 0.0
        %360 = vmatpush2.xpose.msra.mxu0 0.0
        %361 = vmatprep.subr.mxu0 0.0
        %362 = vmatpush2.xpose.msra.mxu0 0.0
        %363 = vmatprep.subr.mxu0 0.0
        %364 = vmatpush2.xpose.msra.mxu0 0.0
        %365 = vmatprep.subr.mxu0 0.0
        %366 = vmatpush2.xpose.msra.mxu0 0.0
        %367 = vmatprep.subr.mxu0 0.0
        %368 = vmatpush2.xpose.msra.mxu0 0.0
        %369 = vmatprep.subr.mxu0 0.0
        %370 = vmatpush2.xpose.msra.mxu0 0.0
        %371 = vmatprep.subr.mxu0 0.0
        %372 = vmatpush2.xpose.msra.mxu0 0.0
        %373 = vmatprep.subr.mxu0 0.0
        %374 = vmatpush2.xpose.msra.mxu0 0.0
        %375 = vmatprep.subr.mxu0 0.0
        %376 = vmatpush2.xpose.msra.mxu0 0.0
        %377 = vmatprep.subr.mxu0 0.0
        %378 = vmatpush2.xpose.msra.mxu0 0.0
        %379 = vmatprep.subr.mxu0 0.0
        %380 = vmatpush2.xpose.msra.mxu0 0.0
        %381 = vmatprep.subr.mxu0 0.0
        %382 = vmatpush2.xpose.msra.mxu0 0.0
        %383 = vmatprep.subr.mxu0 0.0
        %384 = vmatpush2.xpose.msra.mxu0 0.0
        %385 = vmatprep.subr.mxu0 0.0
        %386 = vmatpush2.xpose.msra.mxu0 0.0
        %387 = vmatprep.subr.mxu0 0.0
        %388 = vmatpush2.xpose.msra.mxu0 0.0
        %389 = vmatprep.subr.mxu0 0.0
        %390 = vmatpush2.xpose.msra.mxu0 0.0
        %391 = vmatprep.mubr.f32.mxu0 0.0
        %392 = vmatmul.mubr.f32.gmra.mxu0 %v277
        %v393 = vpop.f32.mrf.mxu0
        %v394 = vadd.f32 0.0, %v393
        %v395 = vpop.f32.mrf.mxu0
        %396 = vdwg.mxu0
        %397 = vst [vmem:[%s218] sm:$0xf] %v394
        %v398 = vld [vmem:[%s246] sm:$0xf]
        %vm399 = vcmask 1043456
        %v400 = vsel %vm399, %v394, 0.0
        %401 = vadd.xlane.f32.xlu0 %v400
        %v402 = vpop.xlane.xlu0 %401
        %v403 = vadd.f32 %v398, %v402
        %vm404 = vcmask 3072
        %405 = vst.msk [vmem:[%s246] sm:$0xf] %vm404, %v403
        %v406 = vld [vmem:[%s250] sm:$0xf]
        %v407 = vmul.f32 %v394, %v394
        %v408 = vsel %vm399, %v407, 0.0
        %409 = vadd.xlane.f32.xlu0 %v408
        %v410 = vpop.xlane.xlu0 %409
        %v411 = vadd.f32 %v406, %v410
        %412 = vst.msk [vmem:[%s250] sm:$0xf] %vm404, %v411
        %s413 = sand.u32 %s94, 1
        %s414 = scalar_lea.sflag [#allocation3], %s413
        %s415 = sand.u32 %s94, 1
        %s416 = smul.addr %s415, 4
        %s417 = scalar_lea.vmem [#allocation2], %s416
        %p418 = scmp.lt.s32.totalorder %s23, 1
        %s419 = scalar_select %p418, %s23, 1
        %s420 = smul.addr %s419, 4
        %s421 = scalar_lea.vmem %s3, %s420
        %p422 = scmp.lt.s32.totalorder %s23, 1
        %s423 = scalar_select %p422, %s23, 1
        %s424 = smul.addr %s423, 4
        %s425 = scalar_lea.vmem %s4, %s424
        // Predicated region
        $region33: #{tpu_custom_call.1} parent=27 // pred_check
          %p426 = pneg %p104
        $region34: #{tpu_custom_call.1} parent=27 // pred_check_branch
          %428 = sbr.rel (%p426) target = $region36
        $region35: #{tpu_custom_call.1} parent=27 // pred_region
          %s429 = smul.u32 %s23, 2
          %s430 = sadd.s32 %s429, %s24
          %s432 = ssub.s32 64, 64
          %433 = vsyncadd %s414, %s432
          %s434 = smul.addr %s430, 64
          %s435 = scalar_lea.hbm %s2, %s434
          %s437 = sshll.u32 %s417, 4
          %s438 = int_to_ptr.vmem [resolvable:$true] %s437
          %440 = dma.vmem_to_hbm [thread:$0]  %s438, 64, %s435, %s414
        $region36: #{tpu_custom_call.1} parent=27 // pred_fallthru
          _
        // Predicated region
        $region37: #{tpu_custom_call.1} parent=27 // pred_check
          %p441 = pneg %p130
        $region38: #{tpu_custom_call.1} parent=27 // pred_check_branch
          %443 = sbr.rel (%p441) target = $region40
        $region39: #{tpu_custom_call.1} parent=27 // pred_region
          _
        $region40: #{tpu_custom_call.1} parent=27 // pred_fallthru
          _
        // Predicated region
        $region41: #{tpu_custom_call.1} parent=27 // pred_check
          %p444 = pneg %p156
        $region42: #{tpu_custom_call.1} parent=27 // pred_check_branch
          %446 = sbr.rel (%p444) target = $region44
        $region43: #{tpu_custom_call.1} parent=27 // pred_region
          _
        $region44: #{tpu_custom_call.1} parent=27 // pred_fallthru
          _
      $region28: #{tpu_custom_call.1} parent=5 // pred_fallthru
        _
      %p447 = scmp.le.s32.totalorder 2, %s14
      // Predicated region
      $region45: #{tpu_custom_call.1} parent=5 // pred_check
        %p448 = pneg %p447
      $region46: #{tpu_custom_call.1} parent=5 // pred_check_branch
        %450 = sbr.rel (%p448) target = $region48
      $region47: #{tpu_custom_call.1} parent=5 // pred_region
        %s451 = ssub.s32 %s14, 2
        // Predicated region
        $region49: #{tpu_custom_call.1} parent=47 // pred_check
          %p452 = pneg %p110
        $region50: #{tpu_custom_call.1} parent=47 // pred_check_branch
          %454 = sbr.rel (%p452) target = $region52
        $region51: #{tpu_custom_call.1} parent=47 // pred_region
          %s455 = sand.u32 %s95, 1
          %s456 = scalar_lea.sflag [#allocation3], %s455
          %s457 = sand.u32 %s95, 1
          %s458 = smul.addr %s457, 4
          %s459 = scalar_lea.vmem [#allocation2], %s458
          %460 = dma.done %s456, 64
        $region52: #{tpu_custom_call.1} parent=47 // pred_fallthru
          _
        // Predicated region
        $region53: #{tpu_custom_call.1} parent=47 // pred_check
          %p461 = pneg %p136
        $region54: #{tpu_custom_call.1} parent=47 // pred_check_branch
          %463 = sbr.rel (%p461) target = $region56
        $region55: #{tpu_custom_call.1} parent=47 // pred_region
          %p464 = scmp.lt.s32.totalorder %s25, 1
          %s465 = scalar_select %p464, %s25, 1
          %s466 = smul.addr %s465, 4
          %s467 = scalar_lea.vmem %s3, %s466
        $region56: #{tpu_custom_call.1} parent=47 // pred_fallthru
          _
        // Predicated region
        $region57: #{tpu_custom_call.1} parent=47 // pred_check
          %p468 = pneg %p162
        $region58: #{tpu_custom_call.1} parent=47 // pred_check_branch
          %470 = sbr.rel (%p468) target = $region60
        $region59: #{tpu_custom_call.1} parent=47 // pred_region
          %p471 = scmp.lt.s32.totalorder %s25, 1
          %s472 = scalar_select %p471, %s25, 1
          %s473 = smul.addr %s472, 4
          %s474 = scalar_lea.vmem %s4, %s473
        $region60: #{tpu_custom_call.1} parent=47 // pred_fallthru
          _
      $region48: #{tpu_custom_call.1} parent=5 // pred_fallthru
        _
    $region6: #{tpu_custom_call.1} parent=1 // loop_footer
      %s18 = sadd.s32 1, %s14
    $region7: #{tpu_custom_call.1} parent=1 // loop_footer_branch
      %13 = sbr.rel target = $region3
    $region8: #{tpu_custom_call.1} parent=1 // loop_exit
      _
    %475 = vsyncpa [#allocation3], 1
    %s476 = scalar_lea.sflag [#allocation3], 1
    %477 = vsyncpa %s476, 1

</llo_original>
